<compile_context>
chip_gen: v7x
topology: tpu7x:2x2x1
jax: 0.10.0
libtpu: 0.0.40
codegen_flags: <defaults>
</compile_context>

<pallas_src>
import math

import jax
import jax.numpy as jnp
from jax.experimental import pallas as pl
from jax.experimental.pallas import tpu as pltpu

_LANE = 128
_TARGET_TILE_BYTES = 4 * 1024 * 1024      # ~4 MiB output blocks amortize step overhead
_MAX_PATTERN_BYTES = 512 * 1024           # keep pattern input + alignment unit small
_VMEM_LIMIT_BYTES = 32 * 1024 * 1024      # <= physical VMEM on v5e/v6e/v7x


def _round_up(x, m):
    return -(-x // m) * m


def _lcm(a, b):
    return a * b // math.gcd(a, b)


# ----------------------------- Pallas kernel ------------------------------- #
def _replicate_kernel(pattern_ref, out_ref):
    """Vertically tile the (P, L) pattern block to fill the (TB, L) out block.

    Every output block starts at a row index that is a multiple of P (enforced
    by the wrapper), so the pattern phase is always 0 at the block start.
    The broadcast/tile hides entirely under the output DMA.
    """
    p = pattern_ref.shape[0]
    tb = out_ref.shape[0]
    rep = -(-tb // p)                       # static python int
    tiled = jnp.tile(pattern_ref[...], (rep, 1))
    if rep * p == tb:
        out_ref[...] = tiled
    else:                                   # single-block case only
        out_ref[...] = tiled[:tb, :]


# ------------------------------ Wrapper ------------------------------------ #
def fakenet_forward(x, output):
    """FakeNet.forward: returns (stack of `output` repeated batch times, None).

    x:      any array whose leading dim is the batch size (values unused).
    output: the fixed output tensor stored on the module (any shape / dtype).
    """
    n = int(x.shape[0])
    out_tail = tuple(int(s) for s in output.shape)
    dtype = output.dtype
    itemsize = jnp.dtype(dtype).itemsize
    D = int(math.prod(out_tail)) if out_tail else 1

    # Degenerate cases: nothing to write.
    if n == 0 or D == 0:
        return jnp.zeros((n,) + out_tail, dtype), None

    flat_out = jnp.reshape(output, (D,))
    T = n * D                               # total replicated elements

    # ---- choose lane width L (multiple of 128; prefer L that divides T) ----
    q, r = divmod(T, _LANE)
    if r == 0:
        # Prefer wide lanes, but keep enough rows (>=16) to allow >=2 grid steps.
        m_max = min(32, max(1, q // 16))
        m = 1
        for cand in range(m_max, 0, -1):
            if q % cand == 0:
                m = cand
                break
        L = _LANE * m
        R = T // L                          # exact: no tail padding, no slice
    else:
        L = _LANE                           # minimal lane-dense width
        R = -(-T // L)                      # <128 elements of tail padding

    # Pattern period: P rows cover lcm(D, L) elements, after which the layout repeats.
    P = D // math.gcd(D, L)

    if P * L * itemsize > _MAX_PATTERN_BYTES:
        # Pathological (huge, awkward D): fall back to one batch row per slab
        # row.  Stores may be lane-masked, but VMEM stays bounded and the
        # kernel/tiling logic below is unchanged (L == full last dim).
        L, R, P = D, n, 1

    reps = (P * L) // D
    pattern = jnp.tile(flat_out, reps).reshape(P, L)

    # ---- row tiling: blocks start at pattern phase 0, ~target bytes each ----
    sublane = max(8, 32 // itemsize)        # 8 for f32, 16 for bf16, 32 for int8
    row_align = _lcm(P, sublane)
    row_bytes = L * itemsize
    max_rows = _TARGET_TILE_BYTES // row_bytes
    rows_target = max(row_align, (max_rows // row_align) * row_align)
    rows_half = _round_up(-(-R // 2), row_align)   # keep >=2 steps for v7x megacore
    tb = max(row_align, min(rows_target, rows_half))
    if tb >= R:
        tb = R                              # single full-array block
        grid_steps = 1
    else:
        grid_steps = -(-R // tb)            # Pallas clamps the ragged last block

    result = pl.pallas_call(
        _replicate_kernel,
        grid=(grid_steps,),
        in_specs=[pl.BlockSpec((P, L), lambda i: (0, 0))],
        out_specs=pl.BlockSpec((tb, L), lambda i: (i, 0)),
        out_shape=jax.ShapeDtypeStruct((R, L), dtype),
        compiler_params=pltpu.CompilerParams(
            dimension_semantics=("parallel",),
            vmem_limit_bytes=_VMEM_LIMIT_BYTES,
        ),
        cost_estimate=pl.CostEstimate(
            flops=0,
            transcendentals=0,
            bytes_accessed=R * L * itemsize + P * L * itemsize,
        ),
    )(pattern)

    flat = jnp.reshape(result, (-1,))
    if R * L != T:
        flat = flat[:T]                     # only when n*D isn't a multiple of 128
    out = jnp.reshape(flat, (n,) + out_tail)

    # TODO(synk): get_log_prob / sample (Normal-distribution helpers) and the
    # `.to(device)` placement live outside forward(); not implemented as kernels.
    return out, None


# --------------------------- Reference (pure JAX) --------------------------- #
def fakenet_reference(x, output):
    n = x.shape[0]
    return jnp.broadcast_to(output[None, ...], (n,) + tuple(output.shape)), None


if __name__ == "__main__":
    key = jax.random.PRNGKey(0)
    k_x, k_o1, k_o2, k_o3 = jax.random.split(key, 4)
    IN_DIM = 32

    # Case 1: lane-dense output dim (D=128), batch 256 -> 2 parallel grid steps.
    B1, D1 = 256, 128
    x1 = jax.random.normal(k_x, (B1, IN_DIM), jnp.float32)      # values unused
    out1 = jax.random.normal(k_o1, (D1,), jnp.float32)
    y1, log_std1 = fakenet_forward(x1, out1)
    jax.block_until_ready(y1)
    ref1, ref_none = fakenet_reference(x1, out1)
    assert y1.shape == (B1, D1)
    assert log_std1 is None and ref_none is None
    assert jnp.array_equal(y1, ref1)

    # Case 2: tiny action head (D=6) -> lane-dense slab path with ragged tail.
    B2, D2 = 300, 6
    x2 = jax.random.normal(k_x, (B2, IN_DIM), jnp.float32)
    out2 = jax.random.normal(k_o2, (D2,), jnp.float32)
    y2, _ = fakenet_forward(x2, out2)
    jax.block_until_ready(y2)
    assert jnp.array_equal(y2, jnp.broadcast_to(out2[None, :], (B2, D2)))

    # Case 3: multi-dim output tensor + small, non-aligned batch.
    B3 = 10
    out3 = jax.random.normal(k_o3, (4, 5), jnp.float32)
    x3 = jax.random.normal(k_x, (B3, 7), jnp.float32)
    y3, _ = fakenet_forward(x3, out3)
    jax.block_until_ready(y3)
    assert jnp.array_equal(y3, jnp.broadcast_to(out3[None], (B3, 4, 5)))

    print("KERNEL_OK")
</pallas_src>

<mosaic_0001>
module attributes {stable_mosaic.version = 11 : i64} {
  func.func @_replicate_kernel(%arg0: i32, %arg1: memref<1x2048xf32, #tpu.memory_space<vmem>>, %arg2: memref<8x2048xf32, #tpu.memory_space<vmem>>) attributes {dimension_semantics = [#tpu.dimension_semantics<parallel>], iteration_bounds = array<i64: 2>, scalar_prefetch = 0 : i64, scratch_operands = 0 : i64, tpu.core_type = #tpu.core_type<tc>, window_params = [{pipeline_mode = #tpu.pipeline_mode<synchronous>, transform_indices = @transform_0, window_bounds = array<i64: 1, 2048>}, {transform_indices = @transform_1, window_bounds = array<i64: 8, 2048>}]} {
    %c0 = arith.constant 0 : index
    %c0_0 = arith.constant 0 : index
    %0 = vector.load %arg1[%c0, %c0_0] : memref<1x2048xf32, #tpu.memory_space<vmem>>, vector<1x2048xf32>
    %1 = tpu.concatenate %0, %0, %0, %0, %0, %0, %0, %0 in 0 : vector<1x2048xf32>, vector<1x2048xf32>, vector<1x2048xf32>, vector<1x2048xf32>, vector<1x2048xf32>, vector<1x2048xf32>, vector<1x2048xf32>, vector<1x2048xf32> -> vector<8x2048xf32>
    %c0_1 = arith.constant 0 : index
    %c0_2 = arith.constant 0 : index
    %2 = vector.load %arg2[%c0_1, %c0_2] : memref<8x2048xf32, #tpu.memory_space<vmem>>, vector<8x2048xf32>
    tpu.vector_store %arg2[%c0_1, %c0_2], %1 {strides = array<i32>} : memref<8x2048xf32, #tpu.memory_space<vmem>>, vector<8x2048xf32>,
    return
  }
  func.func @transform_0(%arg0: i32) -> (i32, i32) {
    %c0_i32 = arith.constant 0 : i32
    %c0_i32_0 = arith.constant 0 : i32
    %c0_i32_1 = arith.constant 0 : i32
    return %c0_i32, %c0_i32_0 : i32, i32
  }
  func.func @transform_1(%arg0: i32) -> (i32, i32) {
    %c0_i32 = arith.constant 0 : i32
    %c0_i32_0 = arith.constant 0 : i32
    return %arg0, %c0_i32 : i32, i32
  }
}

</mosaic_0001>

<llo_original>
// kernel: tpu_custom_call.1
$region0: #{tpu_custom_call.1}
  #allocation0 [shape = 'u32[]', space=smem, size = 0x4, offset = 0x4, fixed_abs, tag = 'smem constant byte address 0x4 - core index']
  #allocation1 [shape = 'u32[144,128]{1,0:T(1,128)}', space=vmem, size = 0x12000, scoped, tag = 'internal scratch']
  %s0 = inlined_call_operand.hbm [shape: f32[1,2048], index: 0, kind: input, shape index: {}]
  %s1 = inlined_call_operand.hbm [shape: f32[16,2048], index: 1, kind: output, shape index: {}]
  %s2 = sld [smem:[#allocation0]]
  $region41: #{tpu_custom_call.1} parent=0
    _
  %s4 = ssub.s32 1, %s2
  %s5 = scalar_select 0, %s4, %s2
  $region1: #{tpu_custom_call.1} parent=0
    #allocation2 [shape = 'u8[8192]{0}', space=vmem, size = 0x2000, scoped, tag = 'input window, operand 0, single buffered']
    #allocation3 [shape = 's32[2]{0}', space=sflag, size = 0x8, scoped, tag = 'scoped memory for tpu_custom_call.1']
    #allocation4 [shape = 's32[2]{0}', space=sflag, size = 0x8, scoped, tag = 'scoped memory for tpu_custom_call.1']
    #allocation5 [shape = 'u8[131072]{0}', space=vmem, size = 0x20000, scoped, tag = 'output window, operand 0']
    %6 = vsyncpa [#allocation3], 0
    %7 = vsyncpa [#allocation4], 0
    %s8 = scalar_lea.sflag [#allocation4], 1
    %9 = vsyncpa %s8, 0
    loop: start=0, step=1, limit=4
    $region2: #{tpu_custom_call.1} parent=1 // loop_pre_header
      _
    $region3: #{tpu_custom_call.1} parent=1 // loop_header
      %s11 = sphi 0, %s15
      %p12 = scmp.ge.s32.totalorder %s11, 4
      %s19 = sphi 0, %s19
      %s21 = sphi 0, %s19
      %s22 = sphi 0, %s21
      %s36 = sphi 0, %s22
      %s42 = sphi 0, %s44
      %s45 = sphi 0, %s42
      %s46 = sphi 0, %s45
      %s62 = sphi 0, %s46
    $region4: #{tpu_custom_call.1} parent=1 // loop_header_branch
      %14 = sbr.rel (%p12) target = $region8
    $region5: #{tpu_custom_call.1} parent=1 // loop_body
      %s16 = ssub.s32 %s11, 1
      %s17 = ssub.s32 %s11, 2
      %s18 = sadd.s32 %s11, 1
      %s20 = sadd.s32 %s19, 1
      %p23 = scmp.eq.s32.totalorder %s11, 1
      %p24 = scmp.ne.s32.totalorder %s19, %s21
      %p25 = scmp.eq.s32.totalorder %s11, 0
      %p26 = por %p24, %p25
      %p27 = scmp.ne.s32.totalorder %s19, %s21
      %p28 = scmp.eq.s32.totalorder %s16, 1
      %p29 = por %p27, %p28
      %p30 = scmp.ne.s32.totalorder %s21, %s22
      %p31 = scmp.eq.s32.totalorder %s16, 0
      %p32 = por %p30, %p31
      %p33 = scmp.ne.s32.totalorder %s21, %s22
      %p34 = scmp.eq.s32.totalorder %s17, 1
      %p35 = por %p33, %p34
      %p37 = scmp.ne.s32.totalorder %s22, %s36
      %p38 = scmp.eq.s32.totalorder %s17, 0
      %p39 = por %p37, %p38
      %s40 = ssub.s32 %s11, %s18
      %p41 = scmp.eq.s32.totalorder %s40, 0
      %s43 = sadd.s32 %s42, 1
      %s44 = scalar_select %p41, %s42, %s43
      %p47 = pneg %p41
      %p48 = scmp.eq.s32.totalorder %s11, 1
      %p49 = por %p47, %p48
      %p50 = scmp.ne.s32.totalorder %s42, %s45
      %p51 = scmp.eq.s32.totalorder %s11, 0
      %p52 = por %p50, %p51
      %p53 = scmp.ne.s32.totalorder %s42, %s45
      %p54 = scmp.eq.s32.totalorder %s16, 1
      %p55 = por %p53, %p54
      %p56 = scmp.ne.s32.totalorder %s45, %s46
      %p57 = scmp.eq.s32.totalorder %s16, 0
      %p58 = por %p56, %p57
      %p59 = scmp.ne.s32.totalorder %s45, %s46
      %p60 = scmp.eq.s32.totalorder %s17, 1
      %p61 = por %p59, %p60
      %p63 = scmp.ne.s32.totalorder %s46, %s62
      %p64 = scmp.eq.s32.totalorder %s17, 0
      %p65 = por %p63, %p64
      %p66 = scmp.le.s32.totalorder 1, %s11
      %p67 = scmp.lt.s32.totalorder %s11, 3
      %p68 = pnand %p66, %p67
      %p69 = pneg %p68
      // Predicated region
      $region9: #{tpu_custom_call.1} parent=5 // pred_check
        _
      $region10: #{tpu_custom_call.1} parent=5 // pred_check_branch
        %71 = sbr.rel (%p68) target = $region12
      $region11: #{tpu_custom_call.1} parent=5 // pred_region
        %s72 = ssub.s32 %s11, 1
        // Predicated region
        $region13: #{tpu_custom_call.1} parent=11 // pred_check
          %p73 = pneg %p32
        $region14: #{tpu_custom_call.1} parent=11 // pred_check_branch
          %75 = sbr.rel (%p73) target = $region16
        $region15: #{tpu_custom_call.1} parent=11 // pred_region
          %s77 = ssub.s32 256, 256
          %78 = vsyncadd [#allocation3], %s77
          %s80 = sshll.u32 [#allocation2], 4
          %s81 = int_to_ptr.vmem [resolvable:$true] %s80
          %83 = dma.hbm_to_vmem [thread:$0]  %s0, 256, %s81, [#allocation3]
        $region16: #{tpu_custom_call.1} parent=11 // pred_fallthru
          _
      $region12: #{tpu_custom_call.1} parent=5 // pred_fallthru
        _
      %p84 = scmp.lt.s32.totalorder %s11, 2
      // Predicated region
      $region17: #{tpu_custom_call.1} parent=5 // pred_check
        %p85 = pneg %p84
      $region18: #{tpu_custom_call.1} parent=5 // pred_check_branch
        %87 = sbr.rel (%p85) target = $region20
      $region19: #{tpu_custom_call.1} parent=5 // pred_region
        _
      $region20: #{tpu_custom_call.1} parent=5 // pred_fallthru
        _
      %p88 = scmp.le.s32.totalorder 1, %s11
      %p89 = scmp.lt.s32.totalorder %s11, 3
      %p90 = pnand %p88, %p89
      %p91 = pneg %p90
      // Predicated region
      $region21: #{tpu_custom_call.1} parent=5 // pred_check
        _
      $region22: #{tpu_custom_call.1} parent=5 // pred_check_branch
        %93 = sbr.rel (%p90) target = $region24
      $region23: #{tpu_custom_call.1} parent=5 // pred_region
        %s94 = ssub.s32 %s11, 1
        // Predicated region
        $region25: #{tpu_custom_call.1} parent=23 // pred_check
          %p95 = pneg %p32
        $region26: #{tpu_custom_call.1} parent=23 // pred_check_branch
          %97 = sbr.rel (%p95) target = $region28
        $region27: #{tpu_custom_call.1} parent=23 // pred_region
          %98 = dma.done [#allocation3], 256
        $region28: #{tpu_custom_call.1} parent=23 // pred_fallthru
          _
        %p99 = pneg %p32
        %p100 = pneg %p29
        %p101 = pneg %p58
        %p102 = pneg %p55
        %s103 = sand.u32 %s45, 1
        %s104 = scalar_lea.sflag [#allocation4], %s103
        %s105 = sand.u32 %s45, 1
        %s106 = smul.addr %s105, 128
        %s107 = scalar_lea.vmem [#allocation5], %s106
        %v108 = vld [vmem:[#allocation2] sm:$0xff]
        %v109 = vld [vmem:[#allocation2 + $0x8] sm:$0xff]
        %v112 = vlaneseq
        %v113 = vshrl.u32 %v112, 7
        %v114 = vsub.s32 0, %v113
        %v115 = vrot.slane %v108, %v114
        %v116 = vlaneseq
        %v117 = vshrl.u32 %v116, 7
        %v118 = vsub.s32 1, %v117
        %v119 = vrot.slane %v108, %v118
        %v120 = vlaneseq
        %v121 = vshrl.u32 %v120, 7
        %v122 = vsub.s32 2, %v121
        %v123 = vrot.slane %v108, %v122
        %v124 = vlaneseq
        %v125 = vshrl.u32 %v124, 7
        %v126 = vsub.s32 3, %v125
        %v127 = vrot.slane %v108, %v126
        %v128 = vlaneseq
        %v129 = vshrl.u32 %v128, 7
        %v130 = vsub.s32 4, %v129
        %v131 = vrot.slane %v108, %v130
        %v132 = vlaneseq
        %v133 = vshrl.u32 %v132, 7
        %v134 = vsub.s32 5, %v133
        %v135 = vrot.slane %v108, %v134
        %v136 = vlaneseq
        %v137 = vshrl.u32 %v136, 7
        %v138 = vsub.s32 6, %v137
        %v139 = vrot.slane %v108, %v138
        %v140 = vlaneseq
        %v141 = vshrl.u32 %v140, 7
        %v142 = vsub.s32 7, %v141
        %v143 = vrot.slane %v108, %v142
        %v144 = vlaneseq
        %v145 = vshrl.u32 %v144, 7
        %v146 = vsub.s32 0, %v145
        %v147 = vrot.slane %v109, %v146
        %v148 = vlaneseq
        %v149 = vshrl.u32 %v148, 7
        %v150 = vsub.s32 1, %v149
        %v151 = vrot.slane %v109, %v150
        %v152 = vlaneseq
        %v153 = vshrl.u32 %v152, 7
        %v154 = vsub.s32 2, %v153
        %v155 = vrot.slane %v109, %v154
        %v156 = vlaneseq
        %v157 = vshrl.u32 %v156, 7
        %v158 = vsub.s32 3, %v157
        %v159 = vrot.slane %v109, %v158
        %v160 = vlaneseq
        %v161 = vshrl.u32 %v160, 7
        %v162 = vsub.s32 4, %v161
        %v163 = vrot.slane %v109, %v162
        %v164 = vlaneseq
        %v165 = vshrl.u32 %v164, 7
        %v166 = vsub.s32 5, %v165
        %v167 = vrot.slane %v109, %v166
        %v168 = vlaneseq
        %v169 = vshrl.u32 %v168, 7
        %v170 = vsub.s32 6, %v169
        %v171 = vrot.slane %v109, %v170
        %v172 = vlaneseq
        %v173 = vshrl.u32 %v172, 7
        %v174 = vsub.s32 7, %v173
        %v175 = vrot.slane %v109, %v174
        %vm192 = vcmask 1041408
        %v193 = vsel %vm192, %v115, %v115
        %v194 = vsel %vm192, %v119, %v119
        %v195 = vsel %vm192, %v123, %v123
        %v196 = vsel %vm192, %v127, %v127
        %v197 = vsel %vm192, %v131, %v131
        %v198 = vsel %vm192, %v135, %v135
        %v199 = vsel %vm192, %v139, %v139
        %v200 = vsel %vm192, %v143, %v143
        %v201 = vsel %vm192, %v147, %v147
        %v202 = vsel %vm192, %v151, %v151
        %v203 = vsel %vm192, %v155, %v155
        %v204 = vsel %vm192, %v159, %v159
        %v205 = vsel %vm192, %v163, %v163
        %v206 = vsel %vm192, %v167, %v167
        %v207 = vsel %vm192, %v171, %v171
        %v208 = vsel %vm192, %v175, %v175
        %vm209 = vcmask 1042432
        %v210 = vsel %vm209, %v193, %v115
        %v211 = vsel %vm209, %v194, %v119
        %v212 = vsel %vm209, %v195, %v123
        %v213 = vsel %vm209, %v196, %v127
        %v214 = vsel %vm209, %v197, %v131
        %v215 = vsel %vm209, %v198, %v135
        %v216 = vsel %vm209, %v199, %v139
        %v217 = vsel %vm209, %v200, %v143
        %v218 = vsel %vm209, %v201, %v147
        %v219 = vsel %vm209, %v202, %v151
        %v220 = vsel %vm209, %v203, %v155
        %v221 = vsel %vm209, %v204, %v159
        %v222 = vsel %vm209, %v205, %v163
        %v223 = vsel %vm209, %v206, %v167
        %v224 = vsel %vm209, %v207, %v171
        %v225 = vsel %vm209, %v208, %v175
        %vm226 = vcmask 1043456
        %v227 = vsel %vm226, %v210, %v115
        %v228 = vsel %vm226, %v211, %v119
        %v229 = vsel %vm226, %v212, %v123
        %v230 = vsel %vm226, %v213, %v127
        %v231 = vsel %vm226, %v214, %v131
        %v232 = vsel %vm226, %v215, %v135
        %v233 = vsel %vm226, %v216, %v139
        %v234 = vsel %vm226, %v217, %v143
        %v235 = vsel %vm226, %v218, %v147
        %v236 = vsel %vm226, %v219, %v151
        %v237 = vsel %vm226, %v220, %v155
        %v238 = vsel %vm226, %v221, %v159
        %v239 = vsel %vm226, %v222, %v163
        %v240 = vsel %vm226, %v223, %v167
        %v241 = vsel %vm226, %v224, %v171
        %v242 = vsel %vm226, %v225, %v175
        %vm243 = vcmask 1044480
        %v244 = vsel %vm243, %v227, %v115
        %v245 = vsel %vm243, %v228, %v119
        %v246 = vsel %vm243, %v229, %v123
        %v247 = vsel %vm243, %v230, %v127
        %v248 = vsel %vm243, %v231, %v131
        %v249 = vsel %vm243, %v232, %v135
        %v250 = vsel %vm243, %v233, %v139
        %v251 = vsel %vm243, %v234, %v143
        %v252 = vsel %vm243, %v235, %v147
        %v253 = vsel %vm243, %v236, %v151
        %v254 = vsel %vm243, %v237, %v155
        %v255 = vsel %vm243, %v238, %v159
        %v256 = vsel %vm243, %v239, %v163
        %v257 = vsel %vm243, %v240, %v167
        %v258 = vsel %vm243, %v241, %v171
        %v259 = vsel %vm243, %v242, %v175
        %vm260 = vcmask 1045504
        %v261 = vsel %vm260, %v244, %v115
        %v262 = vsel %vm260, %v245, %v119
        %v263 = vsel %vm260, %v246, %v123
        %v264 = vsel %vm260, %v247, %v127
        %v265 = vsel %vm260, %v248, %v131
        %v266 = vsel %vm260, %v249, %v135
        %v267 = vsel %vm260, %v250, %v139
        %v268 = vsel %vm260, %v251, %v143
        %v269 = vsel %vm260, %v252, %v147
        %v270 = vsel %vm260, %v253, %v151
        %v271 = vsel %vm260, %v254, %v155
        %v272 = vsel %vm260, %v255, %v159
        %v273 = vsel %vm260, %v256, %v163
        %v274 = vsel %vm260, %v257, %v167
        %v275 = vsel %vm260, %v258, %v171
        %v276 = vsel %vm260, %v259, %v175
        %vm277 = vcmask 1046528
        %v278 = vsel %vm277, %v261, %v115
        %v279 = vsel %vm277, %v262, %v119
        %v280 = vsel %vm277, %v263, %v123
        %v281 = vsel %vm277, %v264, %v127
        %v282 = vsel %vm277, %v265, %v131
        %v283 = vsel %vm277, %v266, %v135
        %v284 = vsel %vm277, %v267, %v139
        %v285 = vsel %vm277, %v268, %v143
        %v286 = vsel %vm277, %v269, %v147
        %v287 = vsel %vm277, %v270, %v151
        %v288 = vsel %vm277, %v271, %v155
        %v289 = vsel %vm277, %v272, %v159
        %v290 = vsel %vm277, %v273, %v163
        %v291 = vsel %vm277, %v274, %v167
        %v292 = vsel %vm277, %v275, %v171
        %v293 = vsel %vm277, %v276, %v175
        %294 = vst [vmem:[%s107] sm:$0xff] %v278
        %295 = vst [vmem:[%s107 + $0x8] sm:$0xff] %v279
        %296 = vst [vmem:[%s107 + $0x10] sm:$0xff] %v280
        %297 = vst [vmem:[%s107 + $0x18] sm:$0xff] %v281
        %298 = vst [vmem:[%s107 + $0x20] sm:$0xff] %v282
        %299 = vst [vmem:[%s107 + $0x28] sm:$0xff] %v283
        %300 = vst [vmem:[%s107 + $0x30] sm:$0xff] %v284
        %301 = vst [vmem:[%s107 + $0x38] sm:$0xff] %v285
        %302 = vst [vmem:[%s107 + $0x40] sm:$0xff] %v286
        %303 = vst [vmem:[%s107 + $0x48] sm:$0xff] %v287
        %304 = vst [vmem:[%s107 + $0x50] sm:$0xff] %v288
        %305 = vst [vmem:[%s107 + $0x58] sm:$0xff] %v289
        %306 = vst [vmem:[%s107 + $0x60] sm:$0xff] %v290
        %307 = vst [vmem:[%s107 + $0x68] sm:$0xff] %v291
        %308 = vst [vmem:[%s107 + $0x70] sm:$0xff] %v292
        %309 = vst [vmem:[%s107 + $0x78] sm:$0xff] %v293
        %s310 = sand.u32 %s45, 1
        %s311 = scalar_lea.sflag [#allocation4], %s310
        %s312 = sand.u32 %s45, 1
        %s313 = smul.addr %s312, 128
        %s314 = scalar_lea.vmem [#allocation5], %s313
        // Predicated region
        $region29: #{tpu_custom_call.1} parent=23 // pred_check
          %p315 = pneg %p55
        $region30: #{tpu_custom_call.1} parent=23 // pred_check_branch
          %317 = sbr.rel (%p315) target = $region32
        $region31: #{tpu_custom_call.1} parent=23 // pred_region
          %s319 = ssub.s32 2048, 2048
          %320 = vsyncadd %s311, %s319
          %s321 = smul.addr %s16, 16
          %s322 = smul.addr %s321, 128
          %s323 = scalar_lea.hbm %s1, %s322
          %s325 = sshll.u32 %s314, 4
          %s326 = int_to_ptr.vmem [resolvable:$true] %s325
          %328 = dma.vmem_to_hbm [thread:$0]  %s326, 2048, %s323, %s311
        $region32: #{tpu_custom_call.1} parent=23 // pred_fallthru
          _
      $region24: #{tpu_custom_call.1} parent=5 // pred_fallthru
        _
      %p329 = scmp.le.s32.totalorder 2, %s11
      // Predicated region
      $region33: #{tpu_custom_call.1} parent=5 // pred_check
        %p330 = pneg %p329
      $region34: #{tpu_custom_call.1} parent=5 // pred_check_branch
        %332 = sbr.rel (%p330) target = $region36
      $region35: #{tpu_custom_call.1} parent=5 // pred_region
        %s333 = ssub.s32 %s11, 2
        // Predicated region
        $region37: #{tpu_custom_call.1} parent=35 // pred_check
          %p334 = pneg %p61
        $region38: #{tpu_custom_call.1} parent=35 // pred_check_branch
          %336 = sbr.rel (%p334) target = $region40
        $region39: #{tpu_custom_call.1} parent=35 // pred_region
          %s337 = sand.u32 %s46, 1
          %s338 = scalar_lea.sflag [#allocation4], %s337
          %s339 = sand.u32 %s46, 1
          %s340 = smul.addr %s339, 128
          %s341 = scalar_lea.vmem [#allocation5], %s340
          %342 = dma.done %s338, 2048
        $region40: #{tpu_custom_call.1} parent=35 // pred_fallthru
          _
      $region36: #{tpu_custom_call.1} parent=5 // pred_fallthru
        _
    $region6: #{tpu_custom_call.1} parent=1 // loop_footer
      %s15 = sadd.s32 1, %s11
    $region7: #{tpu_custom_call.1} parent=1 // loop_footer_branch
      %10 = sbr.rel target = $region3
    $region8: #{tpu_custom_call.1} parent=1 // loop_exit
      _
    %343 = vsyncpa [#allocation3], 1
    %s344 = scalar_lea.sflag [#allocation3], 1
    %345 = vsyncpa %s344, 1
    %346 = vsyncpa [#allocation4], 1
    %s347 = scalar_lea.sflag [#allocation4], 1
    %348 = vsyncpa %s347, 1

</llo_original>
